<compile_context>
chip_gen: v5e
topology: v5e:2x2
jax: 0.10.0
libtpu: 0.0.40
codegen_flags: <defaults>
</compile_context>

<pallas_src>
import functools

import jax
import jax.numpy as jnp
from jax import lax
from jax.experimental import pallas as pl
from jax.experimental.pallas import tpu as pltpu


def _round_up(x, m):
    return (x + m - 1) // m * m


def _embed_gather_kernel(ids_ref, table_hbm, out_ref, buf, sems, *,
                         scale, token_tile):
    """Double-buffered DMA row gather + fused sqrt(d_model) scale.

    ids_ref:   (T_pad,)           int32 SMEM (scalar prefetch)
    table_hbm: (V, D)             table in HBM (pl.ANY -> manual DMA)
    out_ref:   (token_tile, D)    VMEM output block
    buf:       (2*token_tile, D)  VMEM gather buffer, two slots
    sems:      (2,)               one DMA semaphore per slot
    """
    i = pl.program_id(0)
    n = pl.num_programs(0)
    slot = i % 2

    def gather_tile(tile_idx, slot_idx):
        # Issue `token_tile` concurrent row DMAs HBM -> VMEM slot `slot_idx`.
        base = tile_idx * token_tile
        dst0 = slot_idx * token_tile

        def issue(t, carry):
            tok = ids_ref[base + t]
            pltpu.make_async_copy(
                table_hbm.at[pl.ds(tok, 1), :],
                buf.at[pl.ds(dst0 + t, 1), :],
                sems.at[slot_idx],
            ).start()
            return carry

        lax.fori_loop(0, token_tile, issue, 0, unroll=8)

    # Prime the pipeline with the first tile (grid axis is sequential).
    @pl.when(i == 0)
    def _():
        gather_tile(0, 0)

    # Prefetch the next tile into the other slot before consuming this one.
    @pl.when(i + 1 < n)
    def _():
        gather_tile(i + 1, (i + 1) % 2)

    # One sized wait covers all `token_tile` row copies of this tile: DMA
    # semaphores accumulate bytes and .wait() only uses the descriptor size,
    # so a (token_tile, D)-sized descriptor on this slot's semaphore suffices.
    off = pl.multiple_of(slot * token_tile, 8)
    tile_view = buf.at[pl.ds(off, token_tile), :]
    pltpu.make_async_copy(tile_view, tile_view, sems.at[slot]).wait()

    # Scale in f32 (precision-safe if table/output are bf16), lane-dense store.
    rows = buf[pl.ds(off, token_tile), :].astype(jnp.float32)
    if scale != 1.0:
        rows = rows * scale
    out_ref[...] = rows.astype(out_ref.dtype)


def embeddings_forward(ids, table, *, scale_embedding=True, token_tile=256,
                       out_dtype=None, vmem_budget_bytes=12 * 1024 * 1024):
    """JAX/Pallas equivalent of Embeddings.forward.

    ids:   (B, S) int token indices
    table: (V, D) embedding weights (row `padding_idx` already zeroed)
    returns (B, S, D) in `out_dtype` (defaults to table.dtype)
    """
    B, S = ids.shape
    V, D = table.shape
    T = B * S
    out_dtype = jnp.dtype(table.dtype) if out_dtype is None else jnp.dtype(out_dtype)
    tab_isz = jnp.dtype(table.dtype).itemsize
    out_isz = out_dtype.itemsize

    # Tile sizing: large tiles amortize the ~0.35us per-grid-step overhead and
    # keep many row DMAs in flight, but 2 gather slots + 2 pipelined output
    # buffers must fit the default scoped-VMEM limit on every generation
    # (16 MiB v5e, 32 MiB v6e/v7x; v7x has only 64 MiB physical per TC).
    bytes_per_tok = D * 2 * (tab_isz + out_isz)
    max_tt = max(8, (vmem_budget_bytes // max(bytes_per_tok, 1)) // 8 * 8)
    tt = min(int(token_tile), max_tt, _round_up(T, 8))
    tt = max(8, _round_up(tt, 8))

    T_pad = pl.cdiv(T, tt) * tt
    grid = (T_pad // tt,)

    # Clamp ids (an out-of-range id would otherwise be an unchecked HBM DMA)
    # and pad the stream to whole tiles (pad tokens gather row 0, sliced off).
    ids_flat = jnp.clip(ids.reshape(T).astype(jnp.int32), 0, V - 1)
    if T_pad != T:
        ids_flat = jnp.concatenate([ids_flat, jnp.zeros((T_pad - T,), jnp.int32)])
    # NOTE: ids live in SMEM for the whole call; for very long token streams
    # (>~64K tokens) chunk the call over T instead of prefetching one huge array.

    scale = float(D) ** 0.5 if scale_embedding else 1.0

    cost = pl.CostEstimate(
        flops=T_pad * D,          # the fused scale
        transcendentals=0,
        bytes_accessed=T_pad * D * (tab_isz + out_isz) + T_pad * 4,
    )

    out = pl.pallas_call(
        functools.partial(_embed_gather_kernel, scale=scale, token_tile=tt),
        out_shape=jax.ShapeDtypeStruct((T_pad, D), out_dtype),
        grid_spec=pltpu.PrefetchScalarGridSpec(
            num_scalar_prefetch=1,                        # ids -> SMEM
            grid=grid,
            in_specs=[pl.BlockSpec(memory_space=pl.ANY)],  # table stays in HBM
            out_specs=pl.BlockSpec((tt, D), lambda i, ids: (i, 0)),
            scratch_shapes=[
                pltpu.VMEM((2 * tt, D), table.dtype),      # two gather slots
                pltpu.SemaphoreType.DMA((2,)),             # one sem per slot
            ],
        ),
        # Cross-step DMA prefetch carries state between grid steps, so the
        # axis must be sequential ("arbitrary"), not "parallel".
        compiler_params=pltpu.CompilerParams(
            dimension_semantics=("arbitrary",)),
        cost_estimate=cost,
    )(ids_flat, table)

    return out[:T].reshape(B, S, D)


def init_embedding_table(key, vocab, d_model, padding_idx=0):
    # nn.Embedding default init: N(0, 1); row at padding_idx is zeroed.
    w = jax.random.normal(key, (vocab, d_model), dtype=jnp.float32)
    w = w.at[padding_idx].set(0.0)
    return w


if __name__ == "__main__":
    key = jax.random.PRNGKey(0)
    k_tab, k_ids = jax.random.split(key)

    B, S = 2, 8               # batch, seq
    vocab, d_model = 64, 128  # lane-dense D (multiple of 128)

    table = init_embedding_table(k_tab, vocab, d_model, padding_idx=0)
    ids = jax.random.randint(k_ids, (B, S), 0, vocab, dtype=jnp.int32)

    # Pure-JAX reference (same semantics as the PyTorch module).
    ref = jnp.take(table, ids, axis=0) * (d_model ** 0.5)

    # Small tile -> grid=(2,), exercises the cross-step double-buffered
    # prefetch path (prime slot 0, prefetch tile 1 while consuming tile 0).
    out_multi = jax.block_until_ready(
        embeddings_forward(ids, table, scale_embedding=True, token_tile=8))
    # Default (large-tile) configuration: single tile at these shapes.
    out_default = jax.block_until_ready(
        embeddings_forward(ids, table, scale_embedding=True))

    assert out_multi.shape == (B, S, d_model)
    assert out_default.shape == (B, S, d_model)
    assert jnp.allclose(out_multi, ref, atol=1e-5, rtol=1e-5)
    assert jnp.allclose(out_default, ref, atol=1e-5, rtol=1e-5)

    print("KERNEL_OK")
</pallas_src>

<mosaic_0001>
module attributes {stable_mosaic.version = 11 : i64} {
  func.func @_embed_gather_kernel(%arg0: i32, %arg1: memref<16xi32, #tpu.memory_space<smem>>, %arg2: memref<64x128xf32, #tpu.memory_space<any>>, %arg3: memref<8x128xf32, #tpu.memory_space<vmem>>, %arg4: memref<16x128xf32, #tpu.memory_space<vmem>>, %arg5: memref<2x!tpu.dma_semaphore, #tpu.memory_space<semaphore_mem>>) attributes {dimension_semantics = [#tpu.dimension_semantics<arbitrary>], iteration_bounds = array<i64: 2>, scalar_prefetch = 1 : i64, scratch_operands = 2 : i64, tpu.core_type = #tpu.core_type<tc>, window_params = [{}, {transform_indices = @transform_1, window_bounds = array<i64: 8, 128>}]} {
    %c2_i32 = arith.constant 2 : i32
    %c0_i32 = arith.constant 0 : i32
    %0 = arith.cmpi eq, %c2_i32, %c0_i32 : i32
    %c1_i32 = arith.constant 1 : i32
    %1 = arith.select %0, %c1_i32, %c2_i32 : i32
    %2 = arith.remsi %arg0, %1 : i32
    %c0_i32_0 = arith.constant 0 : i32
    %3 = arith.cmpi ne, %2, %c0_i32_0 : i32
    %c0_i32_1 = arith.constant 0 : i32
    %4 = arith.cmpi slt, %2, %c0_i32_1 : i32
    %c0_i32_2 = arith.constant 0 : i32
    %5 = arith.cmpi slt, %1, %c0_i32_2 : i32
    %6 = arith.xori %4, %5 : i1
    %7 = arith.andi %6, %3 : i1
    %8 = arith.addi %2, %1 : i32
    %9 = arith.select %7, %8, %2 : i32
    %c0_i32_3 = arith.constant 0 : i32
    %10 = arith.cmpi eq, %arg0, %c0_i32_3 : i32
    %11 = arith.extui %10 : i1 to i32
    %c0_i32_4 = arith.constant 0 : i32
    %12 = arith.cmpi ne, %11, %c0_i32_4 : i32
    scf.if %12 {
      %c0_i32_12 = arith.constant 0 : i32
      %c0_i32_13 = arith.constant 0 : i32
      %28 = arith.addi %c0_i32_13, %c0_i32_12 : i32
      %29 = arith.index_cast %28 : i32 to index
      %30 = memref.load %arg1[%29] : memref<16xi32, #tpu.memory_space<smem>>
      %c0_i32_14 = arith.constant 0 : i32
      %31 = arith.addi %c0_i32_14, %c0_i32_12 : i32
      %c0_i32_15 = arith.constant 0 : i32
      %c0_i32_16 = arith.constant 0 : i32
      %32 = tpu.memref_slice %arg2[%30, %c0_i32_16] : memref<64x128xf32, #tpu.memory_space<any>> -> memref<1x128xf32, #tpu.memory_space<any>>
      %c0_i32_17 = arith.constant 0 : i32
      %33 = tpu.memref_slice %arg4[%31, %c0_i32_17] : memref<16x128xf32, #tpu.memory_space<vmem>> -> memref<1x128xf32, #tpu.memory_space<vmem>>
      %34 = tpu.memref_slice %arg5[%c0_i32_15] : memref<2x!tpu.dma_semaphore, #tpu.memory_space<semaphore_mem>> -> memref<1x!tpu.dma_semaphore, #tpu.memory_space<semaphore_mem>>
      %35 = tpu.memref_squeeze %34 : memref<1x!tpu.dma_semaphore, #tpu.memory_space<semaphore_mem>> -> memref<!tpu.dma_semaphore, #tpu.memory_space<semaphore_mem>>
      tpu.enqueue_dma source(%32 : memref<1x128xf32, #tpu.memory_space<any>>) target(%33 : memref<1x128xf32, #tpu.memory_space<vmem>>) target_semaphore(%35 : memref<!tpu.dma_semaphore, #tpu.memory_space<semaphore_mem>>)
      %c1_i32_18 = arith.constant 1 : i32
      %c0_i32_19 = arith.constant 0 : i32
      %36 = arith.addi %c0_i32_19, %c1_i32_18 : i32
      %37 = arith.index_cast %36 : i32 to index
      %38 = memref.load %arg1[%37] : memref<16xi32, #tpu.memory_space<smem>>
      %c0_i32_20 = arith.constant 0 : i32
      %39 = arith.addi %c0_i32_20, %c1_i32_18 : i32
      %c0_i32_21 = arith.constant 0 : i32
      %c0_i32_22 = arith.constant 0 : i32
      %40 = tpu.memref_slice %arg2[%38, %c0_i32_22] : memref<64x128xf32, #tpu.memory_space<any>> -> memref<1x128xf32, #tpu.memory_space<any>>
      %c0_i32_23 = arith.constant 0 : i32
      %41 = tpu.memref_slice %arg4[%39, %c0_i32_23] : memref<16x128xf32, #tpu.memory_space<vmem>> -> memref<1x128xf32, #tpu.memory_space<vmem>>
      %42 = tpu.memref_slice %arg5[%c0_i32_21] : memref<2x!tpu.dma_semaphore, #tpu.memory_space<semaphore_mem>> -> memref<1x!tpu.dma_semaphore, #tpu.memory_space<semaphore_mem>>
      %43 = tpu.memref_squeeze %42 : memref<1x!tpu.dma_semaphore, #tpu.memory_space<semaphore_mem>> -> memref<!tpu.dma_semaphore, #tpu.memory_space<semaphore_mem>>
      tpu.enqueue_dma source(%40 : memref<1x128xf32, #tpu.memory_space<any>>) target(%41 : memref<1x128xf32, #tpu.memory_space<vmem>>) target_semaphore(%43 : memref<!tpu.dma_semaphore, #tpu.memory_space<semaphore_mem>>)
      %c2_i32_24 = arith.constant 2 : i32
      %c0_i32_25 = arith.constant 0 : i32
      %44 = arith.addi %c0_i32_25, %c2_i32_24 : i32
      %45 = arith.index_cast %44 : i32 to index
      %46 = memref.load %arg1[%45] : memref<16xi32, #tpu.memory_space<smem>>
      %c0_i32_26 = arith.constant 0 : i32
      %47 = arith.addi %c0_i32_26, %c2_i32_24 : i32
      %c0_i32_27 = arith.constant 0 : i32
      %c0_i32_28 = arith.constant 0 : i32
      %48 = tpu.memref_slice %arg2[%46, %c0_i32_28] : memref<64x128xf32, #tpu.memory_space<any>> -> memref<1x128xf32, #tpu.memory_space<any>>
      %c0_i32_29 = arith.constant 0 : i32
      %49 = tpu.memref_slice %arg4[%47, %c0_i32_29] : memref<16x128xf32, #tpu.memory_space<vmem>> -> memref<1x128xf32, #tpu.memory_space<vmem>>
      %50 = tpu.memref_slice %arg5[%c0_i32_27] : memref<2x!tpu.dma_semaphore, #tpu.memory_space<semaphore_mem>> -> memref<1x!tpu.dma_semaphore, #tpu.memory_space<semaphore_mem>>
      %51 = tpu.memref_squeeze %50 : memref<1x!tpu.dma_semaphore, #tpu.memory_space<semaphore_mem>> -> memref<!tpu.dma_semaphore, #tpu.memory_space<semaphore_mem>>
      tpu.enqueue_dma source(%48 : memref<1x128xf32, #tpu.memory_space<any>>) target(%49 : memref<1x128xf32, #tpu.memory_space<vmem>>) target_semaphore(%51 : memref<!tpu.dma_semaphore, #tpu.memory_space<semaphore_mem>>)
      %c3_i32 = arith.constant 3 : i32
      %c0_i32_30 = arith.constant 0 : i32
      %52 = arith.addi %c0_i32_30, %c3_i32 : i32
      %53 = arith.index_cast %52 : i32 to index
      %54 = memref.load %arg1[%53] : memref<16xi32, #tpu.memory_space<smem>>
      %c0_i32_31 = arith.constant 0 : i32
      %55 = arith.addi %c0_i32_31, %c3_i32 : i32
      %c0_i32_32 = arith.constant 0 : i32
      %c0_i32_33 = arith.constant 0 : i32
      %56 = tpu.memref_slice %arg2[%54, %c0_i32_33] : memref<64x128xf32, #tpu.memory_space<any>> -> memref<1x128xf32, #tpu.memory_space<any>>
      %c0_i32_34 = arith.constant 0 : i32
      %57 = tpu.memref_slice %arg4[%55, %c0_i32_34] : memref<16x128xf32, #tpu.memory_space<vmem>> -> memref<1x128xf32, #tpu.memory_space<vmem>>
      %58 = tpu.memref_slice %arg5[%c0_i32_32] : memref<2x!tpu.dma_semaphore, #tpu.memory_space<semaphore_mem>> -> memref<1x!tpu.dma_semaphore, #tpu.memory_space<semaphore_mem>>
      %59 = tpu.memref_squeeze %58 : memref<1x!tpu.dma_semaphore, #tpu.memory_space<semaphore_mem>> -> memref<!tpu.dma_semaphore, #tpu.memory_space<semaphore_mem>>
      tpu.enqueue_dma source(%56 : memref<1x128xf32, #tpu.memory_space<any>>) target(%57 : memref<1x128xf32, #tpu.memory_space<vmem>>) target_semaphore(%59 : memref<!tpu.dma_semaphore, #tpu.memory_space<semaphore_mem>>)
      %c4_i32 = arith.constant 4 : i32
      %c0_i32_35 = arith.constant 0 : i32
      %60 = arith.addi %c0_i32_35, %c4_i32 : i32
      %61 = arith.index_cast %60 : i32 to index
      %62 = memref.load %arg1[%61] : memref<16xi32, #tpu.memory_space<smem>>
      %c0_i32_36 = arith.constant 0 : i32
      %63 = arith.addi %c0_i32_36, %c4_i32 : i32
      %c0_i32_37 = arith.constant 0 : i32
      %c0_i32_38 = arith.constant 0 : i32
      %64 = tpu.memref_slice %arg2[%62, %c0_i32_38] : memref<64x128xf32, #tpu.memory_space<any>> -> memref<1x128xf32, #tpu.memory_space<any>>
      %c0_i32_39 = arith.constant 0 : i32
      %65 = tpu.memref_slice %arg4[%63, %c0_i32_39] : memref<16x128xf32, #tpu.memory_space<vmem>> -> memref<1x128xf32, #tpu.memory_space<vmem>>
      %66 = tpu.memref_slice %arg5[%c0_i32_37] : memref<2x!tpu.dma_semaphore, #tpu.memory_space<semaphore_mem>> -> memref<1x!tpu.dma_semaphore, #tpu.memory_space<semaphore_mem>>
      %67 = tpu.memref_squeeze %66 : memref<1x!tpu.dma_semaphore, #tpu.memory_space<semaphore_mem>> -> memref<!tpu.dma_semaphore, #tpu.memory_space<semaphore_mem>>
      tpu.enqueue_dma source(%64 : memref<1x128xf32, #tpu.memory_space<any>>) target(%65 : memref<1x128xf32, #tpu.memory_space<vmem>>) target_semaphore(%67 : memref<!tpu.dma_semaphore, #tpu.memory_space<semaphore_mem>>)
      %c5_i32 = arith.constant 5 : i32
      %c0_i32_40 = arith.constant 0 : i32
      %68 = arith.addi %c0_i32_40, %c5_i32 : i32
      %69 = arith.index_cast %68 : i32 to index
      %70 = memref.load %arg1[%69] : memref<16xi32, #tpu.memory_space<smem>>
      %c0_i32_41 = arith.constant 0 : i32
      %71 = arith.addi %c0_i32_41, %c5_i32 : i32
      %c0_i32_42 = arith.constant 0 : i32
      %c0_i32_43 = arith.constant 0 : i32
      %72 = tpu.memref_slice %arg2[%70, %c0_i32_43] : memref<64x128xf32, #tpu.memory_space<any>> -> memref<1x128xf32, #tpu.memory_space<any>>
      %c0_i32_44 = arith.constant 0 : i32
      %73 = tpu.memref_slice %arg4[%71, %c0_i32_44] : memref<16x128xf32, #tpu.memory_space<vmem>> -> memref<1x128xf32, #tpu.memory_space<vmem>>
      %74 = tpu.memref_slice %arg5[%c0_i32_42] : memref<2x!tpu.dma_semaphore, #tpu.memory_space<semaphore_mem>> -> memref<1x!tpu.dma_semaphore, #tpu.memory_space<semaphore_mem>>
      %75 = tpu.memref_squeeze %74 : memref<1x!tpu.dma_semaphore, #tpu.memory_space<semaphore_mem>> -> memref<!tpu.dma_semaphore, #tpu.memory_space<semaphore_mem>>
      tpu.enqueue_dma source(%72 : memref<1x128xf32, #tpu.memory_space<any>>) target(%73 : memref<1x128xf32, #tpu.memory_space<vmem>>) target_semaphore(%75 : memref<!tpu.dma_semaphore, #tpu.memory_space<semaphore_mem>>)
      %c6_i32 = arith.constant 6 : i32
      %c0_i32_45 = arith.constant 0 : i32
      %76 = arith.addi %c0_i32_45, %c6_i32 : i32
      %77 = arith.index_cast %76 : i32 to index
      %78 = memref.load %arg1[%77] : memref<16xi32, #tpu.memory_space<smem>>
      %c0_i32_46 = arith.constant 0 : i32
      %79 = arith.addi %c0_i32_46, %c6_i32 : i32
      %c0_i32_47 = arith.constant 0 : i32
      %c0_i32_48 = arith.constant 0 : i32
      %80 = tpu.memref_slice %arg2[%78, %c0_i32_48] : memref<64x128xf32, #tpu.memory_space<any>> -> memref<1x128xf32, #tpu.memory_space<any>>
      %c0_i32_49 = arith.constant 0 : i32
      %81 = tpu.memref_slice %arg4[%79, %c0_i32_49] : memref<16x128xf32, #tpu.memory_space<vmem>> -> memref<1x128xf32, #tpu.memory_space<vmem>>
      %82 = tpu.memref_slice %arg5[%c0_i32_47] : memref<2x!tpu.dma_semaphore, #tpu.memory_space<semaphore_mem>> -> memref<1x!tpu.dma_semaphore, #tpu.memory_space<semaphore_mem>>
      %83 = tpu.memref_squeeze %82 : memref<1x!tpu.dma_semaphore, #tpu.memory_space<semaphore_mem>> -> memref<!tpu.dma_semaphore, #tpu.memory_space<semaphore_mem>>
      tpu.enqueue_dma source(%80 : memref<1x128xf32, #tpu.memory_space<any>>) target(%81 : memref<1x128xf32, #tpu.memory_space<vmem>>) target_semaphore(%83 : memref<!tpu.dma_semaphore, #tpu.memory_space<semaphore_mem>>)
      %c7_i32 = arith.constant 7 : i32
      %c0_i32_50 = arith.constant 0 : i32
      %84 = arith.addi %c0_i32_50, %c7_i32 : i32
      %85 = arith.index_cast %84 : i32 to index
      %86 = memref.load %arg1[%85] : memref<16xi32, #tpu.memory_space<smem>>
      %c0_i32_51 = arith.constant 0 : i32
      %87 = arith.addi %c0_i32_51, %c7_i32 : i32
      %c0_i32_52 = arith.constant 0 : i32
      %c0_i32_53 = arith.constant 0 : i32
      %88 = tpu.memref_slice %arg2[%86, %c0_i32_53] : memref<64x128xf32, #tpu.memory_space<any>> -> memref<1x128xf32, #tpu.memory_space<any>>
      %c0_i32_54 = arith.constant 0 : i32
      %89 = tpu.memref_slice %arg4[%87, %c0_i32_54] : memref<16x128xf32, #tpu.memory_space<vmem>> -> memref<1x128xf32, #tpu.memory_space<vmem>>
      %90 = tpu.memref_slice %arg5[%c0_i32_52] : memref<2x!tpu.dma_semaphore, #tpu.memory_space<semaphore_mem>> -> memref<1x!tpu.dma_semaphore, #tpu.memory_space<semaphore_mem>>
      %91 = tpu.memref_squeeze %90 : memref<1x!tpu.dma_semaphore, #tpu.memory_space<semaphore_mem>> -> memref<!tpu.dma_semaphore, #tpu.memory_space<semaphore_mem>>
      tpu.enqueue_dma source(%88 : memref<1x128xf32, #tpu.memory_space<any>>) target(%89 : memref<1x128xf32, #tpu.memory_space<vmem>>) target_semaphore(%91 : memref<!tpu.dma_semaphore, #tpu.memory_space<semaphore_mem>>)
      %c8_i32_55 = arith.constant 8 : i32
    } else {
    }
    %c1_i32_5 = arith.constant 1 : i32
    %13 = arith.addi %arg0, %c1_i32_5 : i32
    %c2_i32_6 = arith.constant 2 : i32
    %14 = arith.cmpi slt, %13, %c2_i32_6 : i32
    %15 = arith.extui %14 : i1 to i32
    %c0_i32_7 = arith.constant 0 : i32
    %16 = arith.cmpi ne, %15, %c0_i32_7 : i32
    scf.if %16 {
      %c1_i32_12 = arith.constant 1 : i32
      %28 = arith.addi %arg0, %c1_i32_12 : i32
      %c1_i32_13 = arith.constant 1 : i32
      %29 = arith.addi %arg0, %c1_i32_13 : i32
      %c2_i32_14 = arith.constant 2 : i32
      %c0_i32_15 = arith.constant 0 : i32
      %30 = arith.cmpi eq, %c2_i32_14, %c0_i32_15 : i32
      %c1_i32_16 = arith.constant 1 : i32
      %31 = arith.select %30, %c1_i32_16, %c2_i32_14 : i32
      %32 = arith.remsi %29, %31 : i32
      %c0_i32_17 = arith.constant 0 : i32
      %33 = arith.cmpi ne, %32, %c0_i32_17 : i32
      %c0_i32_18 = arith.constant 0 : i32
      %34 = arith.cmpi slt, %32, %c0_i32_18 : i32
      %c0_i32_19 = arith.constant 0 : i32
      %35 = arith.cmpi slt, %31, %c0_i32_19 : i32
      %36 = arith.xori %34, %35 : i1
      %37 = arith.andi %36, %33 : i1
      %38 = arith.addi %32, %31 : i32
      %39 = arith.select %37, %38, %32 : i32
      %c8_i32_20 = arith.constant 8 : i32
      %40 = arith.muli %28, %c8_i32_20 : i32
      %c8_i32_21 = arith.constant 8 : i32
      %41 = arith.muli %39, %c8_i32_21 : i32
      %c0_i32_22 = arith.constant 0 : i32
      %42 = arith.addi %40, %c0_i32_22 : i32
      %43 = arith.index_cast %42 : i32 to index
      %44 = memref.load %arg1[%43] : memref<16xi32, #tpu.memory_space<smem>>
      %45 = arith.addi %41, %c0_i32_22 : i32
      %c0_i32_23 = arith.constant 0 : i32
      %46 = tpu.memref_slice %arg2[%44, %c0_i32_23] : memref<64x128xf32, #tpu.memory_space<any>> -> memref<1x128xf32, #tpu.memory_space<any>>
      %c0_i32_24 = arith.constant 0 : i32
      %47 = tpu.memref_slice %arg4[%45, %c0_i32_24] : memref<16x128xf32, #tpu.memory_space<vmem>> -> memref<1x128xf32, #tpu.memory_space<vmem>>
      %48 = tpu.memref_slice %arg5[%39] : memref<2x!tpu.dma_semaphore, #tpu.memory_space<semaphore_mem>> -> memref<1x!tpu.dma_semaphore, #tpu.memory_space<semaphore_mem>>
      %49 = tpu.memref_squeeze %48 : memref<1x!tpu.dma_semaphore, #tpu.memory_space<semaphore_mem>> -> memref<!tpu.dma_semaphore, #tpu.memory_space<semaphore_mem>>
      tpu.enqueue_dma source(%46 : memref<1x128xf32, #tpu.memory_space<any>>) target(%47 : memref<1x128xf32, #tpu.memory_space<vmem>>) target_semaphore(%49 : memref<!tpu.dma_semaphore, #tpu.memory_space<semaphore_mem>>)
      %c1_i32_25 = arith.constant 1 : i32
      %50 = arith.addi %40, %c1_i32_25 : i32
      %51 = arith.index_cast %50 : i32 to index
      %52 = memref.load %arg1[%51] : memref<16xi32, #tpu.memory_space<smem>>
      %53 = arith.addi %41, %c1_i32_25 : i32
      %c0_i32_26 = arith.constant 0 : i32
      %54 = tpu.memref_slice %arg2[%52, %c0_i32_26] : memref<64x128xf32, #tpu.memory_space<any>> -> memref<1x128xf32, #tpu.memory_space<any>>
      %c0_i32_27 = arith.constant 0 : i32
      %55 = tpu.memref_slice %arg4[%53, %c0_i32_27] : memref<16x128xf32, #tpu.memory_space<vmem>> -> memref<1x128xf32, #tpu.memory_space<vmem>>
      %56 = tpu.memref_slice %arg5[%39] : memref<2x!tpu.dma_semaphore, #tpu.memory_space<semaphore_mem>> -> memref<1x!tpu.dma_semaphore, #tpu.memory_space<semaphore_mem>>
      %57 = tpu.memref_squeeze %56 : memref<1x!tpu.dma_semaphore, #tpu.memory_space<semaphore_mem>> -> memref<!tpu.dma_semaphore, #tpu.memory_space<semaphore_mem>>
      tpu.enqueue_dma source(%54 : memref<1x128xf32, #tpu.memory_space<any>>) target(%55 : memref<1x128xf32, #tpu.memory_space<vmem>>) target_semaphore(%57 : memref<!tpu.dma_semaphore, #tpu.memory_space<semaphore_mem>>)
      %c2_i32_28 = arith.constant 2 : i32
      %58 = arith.addi %40, %c2_i32_28 : i32
      %59 = arith.index_cast %58 : i32 to index
      %60 = memref.load %arg1[%59] : memref<16xi32, #tpu.memory_space<smem>>
      %61 = arith.addi %41, %c2_i32_28 : i32
      %c0_i32_29 = arith.constant 0 : i32
      %62 = tpu.memref_slice %arg2[%60, %c0_i32_29] : memref<64x128xf32, #tpu.memory_space<any>> -> memref<1x128xf32, #tpu.memory_space<any>>
      %c0_i32_30 = arith.constant 0 : i32
      %63 = tpu.memref_slice %arg4[%61, %c0_i32_30] : memref<16x128xf32, #tpu.memory_space<vmem>> -> memref<1x128xf32, #tpu.memory_space<vmem>>
      %64 = tpu.memref_slice %arg5[%39] : memref<2x!tpu.dma_semaphore, #tpu.memory_space<semaphore_mem>> -> memref<1x!tpu.dma_semaphore, #tpu.memory_space<semaphore_mem>>
      %65 = tpu.memref_squeeze %64 : memref<1x!tpu.dma_semaphore, #tpu.memory_space<semaphore_mem>> -> memref<!tpu.dma_semaphore, #tpu.memory_space<semaphore_mem>>
      tpu.enqueue_dma source(%62 : memref<1x128xf32, #tpu.memory_space<any>>) target(%63 : memref<1x128xf32, #tpu.memory_space<vmem>>) target_semaphore(%65 : memref<!tpu.dma_semaphore, #tpu.memory_space<semaphore_mem>>)
      %c3_i32 = arith.constant 3 : i32
      %66 = arith.addi %40, %c3_i32 : i32
      %67 = arith.index_cast %66 : i32 to index
      %68 = memref.load %arg1[%67] : memref<16xi32, #tpu.memory_space<smem>>
      %69 = arith.addi %41, %c3_i32 : i32
      %c0_i32_31 = arith.constant 0 : i32
      %70 = tpu.memref_slice %arg2[%68, %c0_i32_31] : memref<64x128xf32, #tpu.memory_space<any>> -> memref<1x128xf32, #tpu.memory_space<any>>
      %c0_i32_32 = arith.constant 0 : i32
      %71 = tpu.memref_slice %arg4[%69, %c0_i32_32] : memref<16x128xf32, #tpu.memory_space<vmem>> -> memref<1x128xf32, #tpu.memory_space<vmem>>
      %72 = tpu.memref_slice %arg5[%39] : memref<2x!tpu.dma_semaphore, #tpu.memory_space<semaphore_mem>> -> memref<1x!tpu.dma_semaphore, #tpu.memory_space<semaphore_mem>>
      %73 = tpu.memref_squeeze %72 : memref<1x!tpu.dma_semaphore, #tpu.memory_space<semaphore_mem>> -> memref<!tpu.dma_semaphore, #tpu.memory_space<semaphore_mem>>
      tpu.enqueue_dma source(%70 : memref<1x128xf32, #tpu.memory_space<any>>) target(%71 : memref<1x128xf32, #tpu.memory_space<vmem>>) target_semaphore(%73 : memref<!tpu.dma_semaphore, #tpu.memory_space<semaphore_mem>>)
      %c4_i32 = arith.constant 4 : i32
      %74 = arith.addi %40, %c4_i32 : i32
      %75 = arith.index_cast %74 : i32 to index
      %76 = memref.load %arg1[%75] : memref<16xi32, #tpu.memory_space<smem>>
      %77 = arith.addi %41, %c4_i32 : i32
      %c0_i32_33 = arith.constant 0 : i32
      %78 = tpu.memref_slice %arg2[%76, %c0_i32_33] : memref<64x128xf32, #tpu.memory_space<any>> -> memref<1x128xf32, #tpu.memory_space<any>>
      %c0_i32_34 = arith.constant 0 : i32
      %79 = tpu.memref_slice %arg4[%77, %c0_i32_34] : memref<16x128xf32, #tpu.memory_space<vmem>> -> memref<1x128xf32, #tpu.memory_space<vmem>>
      %80 = tpu.memref_slice %arg5[%39] : memref<2x!tpu.dma_semaphore, #tpu.memory_space<semaphore_mem>> -> memref<1x!tpu.dma_semaphore, #tpu.memory_space<semaphore_mem>>
      %81 = tpu.memref_squeeze %80 : memref<1x!tpu.dma_semaphore, #tpu.memory_space<semaphore_mem>> -> memref<!tpu.dma_semaphore, #tpu.memory_space<semaphore_mem>>
      tpu.enqueue_dma source(%78 : memref<1x128xf32, #tpu.memory_space<any>>) target(%79 : memref<1x128xf32, #tpu.memory_space<vmem>>) target_semaphore(%81 : memref<!tpu.dma_semaphore, #tpu.memory_space<semaphore_mem>>)
      %c5_i32 = arith.constant 5 : i32
      %82 = arith.addi %40, %c5_i32 : i32
      %83 = arith.index_cast %82 : i32 to index
      %84 = memref.load %arg1[%83] : memref<16xi32, #tpu.memory_space<smem>>
      %85 = arith.addi %41, %c5_i32 : i32
      %c0_i32_35 = arith.constant 0 : i32
      %86 = tpu.memref_slice %arg2[%84, %c0_i32_35] : memref<64x128xf32, #tpu.memory_space<any>> -> memref<1x128xf32, #tpu.memory_space<any>>
      %c0_i32_36 = arith.constant 0 : i32
      %87 = tpu.memref_slice %arg4[%85, %c0_i32_36] : memref<16x128xf32, #tpu.memory_space<vmem>> -> memref<1x128xf32, #tpu.memory_space<vmem>>
      %88 = tpu.memref_slice %arg5[%39] : memref<2x!tpu.dma_semaphore, #tpu.memory_space<semaphore_mem>> -> memref<1x!tpu.dma_semaphore, #tpu.memory_space<semaphore_mem>>
      %89 = tpu.memref_squeeze %88 : memref<1x!tpu.dma_semaphore, #tpu.memory_space<semaphore_mem>> -> memref<!tpu.dma_semaphore, #tpu.memory_space<semaphore_mem>>
      tpu.enqueue_dma source(%86 : memref<1x128xf32, #tpu.memory_space<any>>) target(%87 : memref<1x128xf32, #tpu.memory_space<vmem>>) target_semaphore(%89 : memref<!tpu.dma_semaphore, #tpu.memory_space<semaphore_mem>>)
      %c6_i32 = arith.constant 6 : i32
      %90 = arith.addi %40, %c6_i32 : i32
      %91 = arith.index_cast %90 : i32 to index
      %92 = memref.load %arg1[%91] : memref<16xi32, #tpu.memory_space<smem>>
      %93 = arith.addi %41, %c6_i32 : i32
      %c0_i32_37 = arith.constant 0 : i32
      %94 = tpu.memref_slice %arg2[%92, %c0_i32_37] : memref<64x128xf32, #tpu.memory_space<any>> -> memref<1x128xf32, #tpu.memory_space<any>>
      %c0_i32_38 = arith.constant 0 : i32
      %95 = tpu.memref_slice %arg4[%93, %c0_i32_38] : memref<16x128xf32, #tpu.memory_space<vmem>> -> memref<1x128xf32, #tpu.memory_space<vmem>>
      %96 = tpu.memref_slice %arg5[%39] : memref<2x!tpu.dma_semaphore, #tpu.memory_space<semaphore_mem>> -> memref<1x!tpu.dma_semaphore, #tpu.memory_space<semaphore_mem>>
      %97 = tpu.memref_squeeze %96 : memref<1x!tpu.dma_semaphore, #tpu.memory_space<semaphore_mem>> -> memref<!tpu.dma_semaphore, #tpu.memory_space<semaphore_mem>>
      tpu.enqueue_dma source(%94 : memref<1x128xf32, #tpu.memory_space<any>>) target(%95 : memref<1x128xf32, #tpu.memory_space<vmem>>) target_semaphore(%97 : memref<!tpu.dma_semaphore, #tpu.memory_space<semaphore_mem>>)
      %c7_i32 = arith.constant 7 : i32
      %98 = arith.addi %40, %c7_i32 : i32
      %99 = arith.index_cast %98 : i32 to index
      %100 = memref.load %arg1[%99] : memref<16xi32, #tpu.memory_space<smem>>
      %101 = arith.addi %41, %c7_i32 : i32
      %c0_i32_39 = arith.constant 0 : i32
      %102 = tpu.memref_slice %arg2[%100, %c0_i32_39] : memref<64x128xf32, #tpu.memory_space<any>> -> memref<1x128xf32, #tpu.memory_space<any>>
      %c0_i32_40 = arith.constant 0 : i32
      %103 = tpu.memref_slice %arg4[%101, %c0_i32_40] : memref<16x128xf32, #tpu.memory_space<vmem>> -> memref<1x128xf32, #tpu.memory_space<vmem>>
      %104 = tpu.memref_slice %arg5[%39] : memref<2x!tpu.dma_semaphore, #tpu.memory_space<semaphore_mem>> -> memref<1x!tpu.dma_semaphore, #tpu.memory_space<semaphore_mem>>
      %105 = tpu.memref_squeeze %104 : memref<1x!tpu.dma_semaphore, #tpu.memory_space<semaphore_mem>> -> memref<!tpu.dma_semaphore, #tpu.memory_space<semaphore_mem>>
      tpu.enqueue_dma source(%102 : memref<1x128xf32, #tpu.memory_space<any>>) target(%103 : memref<1x128xf32, #tpu.memory_space<vmem>>) target_semaphore(%105 : memref<!tpu.dma_semaphore, #tpu.memory_space<semaphore_mem>>)
      %c8_i32_41 = arith.constant 8 : i32
    } else {
    }
    %c8_i32 = arith.constant 8 : i32
    %17 = arith.muli %9, %c8_i32 : i32
    %18 = tpu.assume_multiple %17, 8 : i32
    %c0_i32_8 = arith.constant 0 : i32
    %19 = tpu.memref_slice %arg4[%18, %c0_i32_8] : memref<16x128xf32, #tpu.memory_space<vmem>> -> memref<8x128xf32, #tpu.memory_space<vmem>>
    %c0_i32_9 = arith.constant 0 : i32
    %20 = tpu.memref_slice %arg4[%18, %c0_i32_9] : memref<16x128xf32, #tpu.memory_space<vmem>> -> memref<8x128xf32, #tpu.memory_space<vmem>>
    %21 = tpu.memref_slice %arg5[%9] : memref<2x!tpu.dma_semaphore, #tpu.memory_space<semaphore_mem>> -> memref<1x!tpu.dma_semaphore, #tpu.memory_space<semaphore_mem>>
    %22 = tpu.memref_squeeze %21 : memref<1x!tpu.dma_semaphore, #tpu.memory_space<semaphore_mem>> -> memref<!tpu.dma_semaphore, #tpu.memory_space<semaphore_mem>>
    tpu.wait_dma2 semaphore(%22 : memref<!tpu.dma_semaphore, #tpu.memory_space<semaphore_mem>>) src(%19 : memref<8x128xf32, #tpu.memory_space<vmem>>) dst(%20 : memref<8x128xf32, #tpu.memory_space<vmem>>)
    %23 = arith.index_cast %18 : i32 to index
    %c0 = arith.constant 0 : index
    %24 = vector.load %arg4[%23, %c0] : memref<16x128xf32, #tpu.memory_space<vmem>>, vector<8x128xf32>
    %cst = arith.constant 11.3137083 : f32
    %25 = vector.broadcast %cst : f32 to vector<8x128xf32>
    %26 = arith.mulf %24, %25 : vector<8x128xf32>
    %c0_10 = arith.constant 0 : index
    %c0_11 = arith.constant 0 : index
    %27 = vector.load %arg3[%c0_10, %c0_11] : memref<8x128xf32, #tpu.memory_space<vmem>>, vector<8x128xf32>
    tpu.vector_store %arg3[%c0_10, %c0_11], %26 {strides = array<i32>} : memref<8x128xf32, #tpu.memory_space<vmem>>, vector<8x128xf32>,
    return
  }
  func.func @transform_1(%arg0: i32, %arg1: memref<16xi32, #tpu.memory_space<smem>>) -> (i32, i32) {
    %c0_i32 = arith.constant 0 : i32
    %c0_i32_0 = arith.constant 0 : i32
    return %arg0, %c0_i32 : i32, i32
  }
}

</mosaic_0001>

<llo_original>
// kernel: tpu_custom_call.1
$region0: #{tpu_custom_call.1}
  #allocation0 [shape = 'u32[]', space=smem, size = 0x4, offset = 0x4, fixed_abs, tag = 'smem constant byte address 0x4 - core index']
  #allocation1 [shape = 'u32[72,128]{1,0:T(1,128)}', space=vmem, size = 0x9000, scoped, tag = 'internal scratch']
  #allocation2 [shape = 'f32[16,128]{1,0:T(8,128)}', space=vmem, size = 0x2000, scoped, tag = 'scratch operand']
  #allocation3 [shape = 's32[2]{0}', space=sflag, size = 0x8, scoped, tag = 'scratch operand']
  #allocation4 [shape = 's32[1]{0}', space=sflag, size = 0x4, scoped, tag = 'scoped memory for tpu_custom_call.1']
  #allocation5 [shape = 'u8[512]{0}', space=smem, size = 0x200, scoped, tag = 'prefetched SMEM operand 0']
  #allocation8 [shape = 's32[]', space=sflag, size = 0x4, offset = 0, fixed_abs, tag = 'sflag constant byte address 0x0 - dummy sync flag']
  #allocation9 [shape = 's32[]', space=sflag, size = 0x4, offset = 0, fixed_abs, tag = 'sflag constant byte address 0x0 - dummy sync flag']
  #allocation10 [shape = 'u32[]', space=smem, size = 0x4, offset = 0x44, fixed_abs, tag = 'smem constant byte address 0x44 - assertion arg 0']
  #allocation11 [shape = 'u32[]', space=smem, size = 0x4, offset = 0x48, fixed_abs, tag = 'smem constant byte address 0x48 - assertion arg 1']
  #allocation12 [shape = 's32[]', space=sflag, size = 0x4, offset = 0, fixed_abs, tag = 'sflag constant byte address 0x0 - dummy sync flag']
  #allocation13 [shape = 's32[]', space=sflag, size = 0x4, offset = 0, fixed_abs, tag = 'sflag constant byte address 0x0 - dummy sync flag']
  #allocation14 [shape = 's32[]', space=sflag, size = 0x4, offset = 0, fixed_abs, tag = 'sflag constant byte address 0x0 - dummy sync flag']
  #allocation15 [shape = 's32[]', space=sflag, size = 0x4, offset = 0, fixed_abs, tag = 'sflag constant byte address 0x0 - dummy sync flag']
  #allocation16 [shape = 's32[]', space=sflag, size = 0x4, offset = 0, fixed_abs, tag = 'sflag constant byte address 0x0 - dummy sync flag']
  #allocation17 [shape = 's32[]', space=sflag, size = 0x4, offset = 0, fixed_abs, tag = 'sflag constant byte address 0x0 - dummy sync flag']
  #allocation18 [shape = 's32[]', space=sflag, size = 0x4, offset = 0, fixed_abs, tag = 'sflag constant byte address 0x0 - dummy sync flag']
  #allocation19 [shape = 's32[]', space=sflag, size = 0x4, offset = 0, fixed_abs, tag = 'sflag constant byte address 0x0 - dummy sync flag']
  #allocation20 [shape = 's32[]', space=sflag, size = 0x4, offset = 0, fixed_abs, tag = 'sflag constant byte address 0x0 - dummy sync flag']
  #allocation21 [shape = 's32[]', space=sflag, size = 0x4, offset = 0, fixed_abs, tag = 'sflag constant byte address 0x0 - dummy sync flag']
  #allocation22 [shape = 's32[]', space=sflag, size = 0x4, offset = 0, fixed_abs, tag = 'sflag constant byte address 0x0 - dummy sync flag']
  #allocation23 [shape = 's32[]', space=sflag, size = 0x4, offset = 0, fixed_abs, tag = 'sflag constant byte address 0x0 - dummy sync flag']
  #allocation24 [shape = 's32[]', space=sflag, size = 0x4, offset = 0, fixed_abs, tag = 'sflag constant byte address 0x0 - dummy sync flag']
  #allocation25 [shape = 's32[]', space=sflag, size = 0x4, offset = 0, fixed_abs, tag = 'sflag constant byte address 0x0 - dummy sync flag']
  #allocation26 [shape = 's32[]', space=sflag, size = 0x4, offset = 0, fixed_abs, tag = 'sflag constant byte address 0x0 - dummy sync flag']
  #allocation27 [shape = 's32[]', space=sflag, size = 0x4, offset = 0, fixed_abs, tag = 'sflag constant byte address 0x0 - dummy sync flag']
  #allocation28 [shape = 's32[]', space=sflag, size = 0x4, offset = 0, fixed_abs, tag = 'sflag constant byte address 0x0 - dummy sync flag']
  #allocation29 [shape = 's32[]', space=sflag, size = 0x4, offset = 0, fixed_abs, tag = 'sflag constant byte address 0x0 - dummy sync flag']
  #allocation30 [shape = 's32[]', space=sflag, size = 0x4, offset = 0, fixed_abs, tag = 'sflag constant byte address 0x0 - dummy sync flag']
  #allocation31 [shape = 's32[]', space=sflag, size = 0x4, offset = 0, fixed_abs, tag = 'sflag constant byte address 0x0 - dummy sync flag']
  #allocation32 [shape = 's32[]', space=sflag, size = 0x4, offset = 0, fixed_abs, tag = 'sflag constant byte address 0x0 - dummy sync flag']
  #allocation33 [shape = 's32[]', space=sflag, size = 0x4, offset = 0, fixed_abs, tag = 'sflag constant byte address 0x0 - dummy sync flag']
  #allocation34 [shape = 's32[]', space=sflag, size = 0x4, offset = 0, fixed_abs, tag = 'sflag constant byte address 0x0 - dummy sync flag']
  #allocation35 [shape = 's32[]', space=sflag, size = 0x4, offset = 0, fixed_abs, tag = 'sflag constant byte address 0x0 - dummy sync flag']
  #allocation36 [shape = 's32[]', space=sflag, size = 0x4, offset = 0, fixed_abs, tag = 'sflag constant byte address 0x0 - dummy sync flag']
  #allocation37 [shape = 's32[]', space=sflag, size = 0x4, offset = 0, fixed_abs, tag = 'sflag constant byte address 0x0 - dummy sync flag']
  #allocation38 [shape = 's32[]', space=sflag, size = 0x4, offset = 0, fixed_abs, tag = 'sflag constant byte address 0x0 - dummy sync flag']
  #allocation39 [shape = 's32[]', space=sflag, size = 0x4, offset = 0, fixed_abs, tag = 'sflag constant byte address 0x0 - dummy sync flag']
  #allocation40 [shape = 's32[]', space=sflag, size = 0x4, offset = 0, fixed_abs, tag = 'sflag constant byte address 0x0 - dummy sync flag']
  #allocation41 [shape = 's32[]', space=sflag, size = 0x4, offset = 0, fixed_abs, tag = 'sflag constant byte address 0x0 - dummy sync flag']
  %s0 = inlined_call_operand.hbm [shape: s32[16], index: 0, kind: input, shape index: {}]
  %s1 = inlined_call_operand.hbm [shape: f32[64,128], index: 1, kind: input, shape index: {}]
  %s2 = inlined_call_operand.hbm [shape: f32[16,128], index: 2, kind: output, shape index: {}]
  %s3 = sld [smem:[#allocation0]]
  $region97: #{tpu_custom_call.1} parent=0
    _
  %s5 = ssub.s32 1, %s3
  %s6 = scalar_select 0, %s5, %s3
  %s8 = sshll.u32 %s0, 4
  %s9 = int_to_ptr.hbm [resolvable:$true] %s8
  %11 = dma.hbm_to_smem %s9, 16, [#allocation5], [#allocation4]
  %13 = dma.done [#allocation4], 16
  %14 = sfence
  $region1: #{tpu_custom_call.1} parent=0
    #allocation6 [shape = 'u8[8192]{0}', space=vmem, size = 0x2000, scoped, tag = 'output window, operand 0']
    #allocation7 [shape = 's32[2]{0}', space=sflag, size = 0x8, scoped, tag = 'scoped memory for tpu_custom_call.1']
    %15 = vsyncpa [#allocation7], 0
    %s16 = scalar_lea.sflag [#allocation7], 1
    %17 = vsyncpa %s16, 0
    loop: start=0, step=1, limit=3
    $region2: #{tpu_custom_call.1} parent=1 // loop_pre_header
      _
    $region3: #{tpu_custom_call.1} parent=1 // loop_header
      %s19 = sphi 0, %s23
      %p20 = scmp.ge.s32.totalorder %s19, 3
      %s28 = sphi 0, %s30
      %s31 = sphi 0, %s28
      %s41 = sphi 0, %s31
    $region4: #{tpu_custom_call.1} parent=1 // loop_header_branch
      %22 = sbr.rel (%p20) target = $region8
    $region5: #{tpu_custom_call.1} parent=1 // loop_body
      %s24 = ssub.s32 %s19, 1
      %s25 = sadd.s32 %s19, 1
      %s26 = ssub.s32 %s19, %s25
      %p27 = scmp.eq.s32.totalorder %s26, 0
      %s29 = sadd.s32 %s28, 1
      %s30 = scalar_select %p27, %s28, %s29
      %p32 = pneg %p27
      %p33 = scmp.eq.s32.totalorder %s19, 1
      %p34 = por %p32, %p33
      %p35 = scmp.ne.s32.totalorder %s28, %s31
      %p36 = scmp.eq.s32.totalorder %s19, 0
      %p37 = por %p35, %p36
      %p38 = scmp.ne.s32.totalorder %s28, %s31
      %p39 = scmp.eq.s32.totalorder %s24, 1
      %p40 = por %p38, %p39
      %p42 = scmp.ne.s32.totalorder %s31, %s41
      %p43 = scmp.eq.s32.totalorder %s24, 0
      %p44 = por %p42, %p43
      %p45 = scmp.lt.s32.totalorder %s19, 2
      // Predicated region
      $region9: #{tpu_custom_call.1} parent=5 // pred_check
        %p46 = pneg %p45
      $region10: #{tpu_custom_call.1} parent=5 // pred_check_branch
        %48 = sbr.rel (%p46) target = $region12
      $region11: #{tpu_custom_call.1} parent=5 // pred_region
        %p49 = pneg %p37
        %p50 = pneg %p34
        %s51 = sand.u32 %s28, 1
        %s52 = scalar_lea.sflag [#allocation7], %s51
        %s53 = sand.u32 %s28, 1
        %s54 = smul.addr %s53, 8
        %s55 = scalar_lea.vmem [#allocation6], %s54
        %p56 = scmp.lt.s32.totalorder %s19, 0
        %s57 = ssub.s32 0, %s19
        %s58 = scalar_select %p56, %s57, %s19
        %s59 = sand.u32 %s58, 1
        %s60 = ssub.s32 0, %s59
        %s61 = scalar_select %p56, %s60, %s59
        %p62 = scmp.ne.s32.totalorder %s61, 0
        %p63 = scmp.lt.s32.totalorder %s61, 0
        %p64 = pnand %p63, %p62
        %p65 = pneg %p64
        %s66 = sadd.s32 %s61, 2
        %s67 = scalar_select %p65, %s66, %s61
        %p68 = scmp.eq.s32.totalorder %s19, 0
        // Predicated region
        $region13: #{tpu_custom_call.1} parent=11 // pred_check
          %p69 = pneg %p68
        $region14: #{tpu_custom_call.1} parent=11 // pred_check_branch
          %71 = sbr.rel (%p69) target = $region16
        $region15: #{tpu_custom_call.1} parent=11 // pred_region
          %s72 = sld [smem:[#allocation5]]
          %s73 = scalar_lea.hbm %s1, %s72
          // Predicated region
          $region17: #{tpu_custom_call.1} parent=15 // pred_check
            _
          $region18: #{tpu_custom_call.1} parent=15 // pred_check_branch
            %75 = sbr.rel target = $region20
          $region19: #{tpu_custom_call.1} parent=15 // pred_region
            %76 = sst [smem:[#allocation10]] [#allocation9]
            %77 = sst [smem:[#allocation11]] [#allocation8]
          $region20: #{tpu_custom_call.1} parent=15 // pred_fallthru
            _
          %79 = shalt.err (0)
          %s81 = sshll.u32 %s73, 4
          %s82 = int_to_ptr.hbm [resolvable:$true] %s81
          %s83 = sshll.u32 [#allocation2], 4
          %s84 = int_to_ptr.vmem [resolvable:$true] %s83
          %86 = dma.hbm_to_vmem [thread:$0]  %s82, 16, %s84, [#allocation3]
          %s87 = sld [smem:[#allocation5 + $0x1]]
          %s88 = scalar_lea.hbm %s1, %s87
          %s89 = scalar_lea.vmem [#allocation2], 1
          // Predicated region
          $region21: #{tpu_custom_call.1} parent=15 // pred_check
            _
          $region22: #{tpu_custom_call.1} parent=15 // pred_check_branch
            %91 = sbr.rel target = $region24
          $region23: #{tpu_custom_call.1} parent=15 // pred_region
            %92 = sst [smem:[#allocation10]] [#allocation13]
            %93 = sst [smem:[#allocation11]] [#allocation12]
          $region24: #{tpu_custom_call.1} parent=15 // pred_fallthru
            _
          %95 = shalt.err (0)
          %s97 = sshll.u32 %s88, 4
          %s98 = int_to_ptr.hbm [resolvable:$true] %s97
          %s99 = sshll.u32 %s89, 4
          %s100 = int_to_ptr.vmem [resolvable:$true] %s99
          %102 = dma.hbm_to_vmem [thread:$0]  %s98, 16, %s100, [#allocation3]
          %s103 = sld [smem:[#allocation5 + $0x2]]
          %s104 = scalar_lea.hbm %s1, %s103
          %s105 = scalar_lea.vmem [#allocation2], 2
          // Predicated region
          $region25: #{tpu_custom_call.1} parent=15 // pred_check
            _
          $region26: #{tpu_custom_call.1} parent=15 // pred_check_branch
            %107 = sbr.rel target = $region28
          $region27: #{tpu_custom_call.1} parent=15 // pred_region
            %108 = sst [smem:[#allocation10]] [#allocation15]
            %109 = sst [smem:[#allocation11]] [#allocation14]
          $region28: #{tpu_custom_call.1} parent=15 // pred_fallthru
            _
          %111 = shalt.err (0)
          %s113 = sshll.u32 %s104, 4
          %s114 = int_to_ptr.hbm [resolvable:$true] %s113
          %s115 = sshll.u32 %s105, 4
          %s116 = int_to_ptr.vmem [resolvable:$true] %s115
          %118 = dma.hbm_to_vmem [thread:$0]  %s114, 16, %s116, [#allocation3]
          %s119 = sld [smem:[#allocation5 + $0x3]]
          %s120 = scalar_lea.hbm %s1, %s119
          %s121 = scalar_lea.vmem [#allocation2], 3
          // Predicated region
          $region29: #{tpu_custom_call.1} parent=15 // pred_check
            _
          $region30: #{tpu_custom_call.1} parent=15 // pred_check_branch
            %123 = sbr.rel target = $region32
          $region31: #{tpu_custom_call.1} parent=15 // pred_region
            %124 = sst [smem:[#allocation10]] [#allocation17]
            %125 = sst [smem:[#allocation11]] [#allocation16]
          $region32: #{tpu_custom_call.1} parent=15 // pred_fallthru
            _
          %127 = shalt.err (0)
          %s129 = sshll.u32 %s120, 4
          %s130 = int_to_ptr.hbm [resolvable:$true] %s129
          %s131 = sshll.u32 %s121, 4
          %s132 = int_to_ptr.vmem [resolvable:$true] %s131
          %134 = dma.hbm_to_vmem [thread:$0]  %s130, 16, %s132, [#allocation3]
          %s135 = sld [smem:[#allocation5 + $0x4]]
          %s136 = scalar_lea.hbm %s1, %s135
          %s137 = scalar_lea.vmem [#allocation2], 4
          // Predicated region
          $region33: #{tpu_custom_call.1} parent=15 // pred_check
            _
          $region34: #{tpu_custom_call.1} parent=15 // pred_check_branch
            %139 = sbr.rel target = $region36
          $region35: #{tpu_custom_call.1} parent=15 // pred_region
            %140 = sst [smem:[#allocation10]] [#allocation19]
            %141 = sst [smem:[#allocation11]] [#allocation18]
          $region36: #{tpu_custom_call.1} parent=15 // pred_fallthru
            _
          %143 = shalt.err (0)
          %s145 = sshll.u32 %s136, 4
          %s146 = int_to_ptr.hbm [resolvable:$true] %s145
          %s147 = sshll.u32 %s137, 4
          %s148 = int_to_ptr.vmem [resolvable:$true] %s147
          %150 = dma.hbm_to_vmem [thread:$0]  %s146, 16, %s148, [#allocation3]
          %s151 = sld [smem:[#allocation5 + $0x5]]
          %s152 = scalar_lea.hbm %s1, %s151
          %s153 = scalar_lea.vmem [#allocation2], 5
          // Predicated region
          $region37: #{tpu_custom_call.1} parent=15 // pred_check
            _
          $region38: #{tpu_custom_call.1} parent=15 // pred_check_branch
            %155 = sbr.rel target = $region40
          $region39: #{tpu_custom_call.1} parent=15 // pred_region
            %156 = sst [smem:[#allocation10]] [#allocation21]
            %157 = sst [smem:[#allocation11]] [#allocation20]
          $region40: #{tpu_custom_call.1} parent=15 // pred_fallthru
            _
          %159 = shalt.err (0)
          %s161 = sshll.u32 %s152, 4
          %s162 = int_to_ptr.hbm [resolvable:$true] %s161
          %s163 = sshll.u32 %s153, 4
          %s164 = int_to_ptr.vmem [resolvable:$true] %s163
          %166 = dma.hbm_to_vmem [thread:$0]  %s162, 16, %s164, [#allocation3]
          %s167 = sld [smem:[#allocation5 + $0x6]]
          %s168 = scalar_lea.hbm %s1, %s167
          %s169 = scalar_lea.vmem [#allocation2], 6
          // Predicated region
          $region41: #{tpu_custom_call.1} parent=15 // pred_check
            _
          $region42: #{tpu_custom_call.1} parent=15 // pred_check_branch
            %171 = sbr.rel target = $region44
          $region43: #{tpu_custom_call.1} parent=15 // pred_region
            %172 = sst [smem:[#allocation10]] [#allocation23]
            %173 = sst [smem:[#allocation11]] [#allocation22]
          $region44: #{tpu_custom_call.1} parent=15 // pred_fallthru
            _
          %175 = shalt.err (0)
          %s177 = sshll.u32 %s168, 4
          %s178 = int_to_ptr.hbm [resolvable:$true] %s177
          %s179 = sshll.u32 %s169, 4
          %s180 = int_to_ptr.vmem [resolvable:$true] %s179
          %182 = dma.hbm_to_vmem [thread:$0]  %s178, 16, %s180, [#allocation3]
          %s183 = sld [smem:[#allocation5 + $0x7]]
          %s184 = scalar_lea.hbm %s1, %s183
          %s185 = scalar_lea.vmem [#allocation2], 7
          // Predicated region
          $region45: #{tpu_custom_call.1} parent=15 // pred_check
            _
          $region46: #{tpu_custom_call.1} parent=15 // pred_check_branch
            %187 = sbr.rel target = $region48
          $region47: #{tpu_custom_call.1} parent=15 // pred_region
            %188 = sst [smem:[#allocation10]] [#allocation25]
            %189 = sst [smem:[#allocation11]] [#allocation24]
          $region48: #{tpu_custom_call.1} parent=15 // pred_fallthru
            _
          %191 = shalt.err (0)
          %s193 = sshll.u32 %s184, 4
          %s194 = int_to_ptr.hbm [resolvable:$true] %s193
          %s195 = sshll.u32 %s185, 4
          %s196 = int_to_ptr.vmem [resolvable:$true] %s195
          %198 = dma.hbm_to_vmem [thread:$0]  %s194, 16, %s196, [#allocation3]
        $region16: #{tpu_custom_call.1} parent=11 // pred_fallthru
          _
        %s199 = sadd.s32 %s19, 1
        %p200 = scmp.lt.s32.totalorder %s199, 2
        // Predicated region
        $region49: #{tpu_custom_call.1} parent=11 // pred_check
          %p201 = pneg %p200
        $region50: #{tpu_custom_call.1} parent=11 // pred_check_branch
          %203 = sbr.rel (%p201) target = $region52
        $region51: #{tpu_custom_call.1} parent=11 // pred_region
          %p204 = scmp.lt.s32.totalorder %s199, 0
          %s205 = ssub.s32 0, %s199
          %s206 = scalar_select %p204, %s205, %s199
          %s207 = sand.u32 %s206, 1
          %s208 = ssub.s32 0, %s207
          %s209 = scalar_select %p204, %s208, %s207
          %p210 = scmp.ne.s32.totalorder %s209, 0
          %p211 = scmp.lt.s32.totalorder %s209, 0
          %p212 = pnand %p211, %p210
          %p213 = pneg %p212
          %s214 = sadd.s32 %s209, 2
          %s215 = scalar_select %p213, %s214, %s209
          %s216 = smul.u32 %s199, 8
          %s217 = smul.u32 %s215, 8
          %s218 = sld [smem:[#allocation5 + %s216]]
          %s219 = scalar_lea.hbm %s1, %s218
          %s220 = scalar_lea.vmem [#allocation2], %s217
          %s221 = scalar_lea.sflag [#allocation3], %s215
          // Predicated region
          $region53: #{tpu_custom_call.1} parent=51 // pred_check
            _
          $region54: #{tpu_custom_call.1} parent=51 // pred_check_branch
            %223 = sbr.rel target = $region56
          $region55: #{tpu_custom_call.1} parent=51 // pred_region
            %224 = sst [smem:[#allocation10]] [#allocation27]
            %225 = sst [smem:[#allocation11]] [#allocation26]
          $region56: #{tpu_custom_call.1} parent=51 // pred_fallthru
            _
          %227 = shalt.err (0)
          %s229 = sshll.u32 %s219, 4
          %s230 = int_to_ptr.hbm [resolvable:$true] %s229
          %s231 = sshll.u32 %s220, 4
          %s232 = int_to_ptr.vmem [resolvable:$true] %s231
          %234 = dma.hbm_to_vmem [thread:$0]  %s230, 16, %s232, %s221
          %s235 = sadd.s32 %s216, 1
          %s236 = sld [smem:[#allocation5 + %s235]]
          %s237 = sadd.s32 %s217, 1
          %s238 = scalar_lea.hbm %s1, %s236
          %s239 = scalar_lea.vmem [#allocation2], %s237
          // Predicated region
          $region57: #{tpu_custom_call.1} parent=51 // pred_check
            _
          $region58: #{tpu_custom_call.1} parent=51 // pred_check_branch
            %241 = sbr.rel target = $region60
          $region59: #{tpu_custom_call.1} parent=51 // pred_region
            %242 = sst [smem:[#allocation10]] [#allocation29]
            %243 = sst [smem:[#allocation11]] [#allocation28]
          $region60: #{tpu_custom_call.1} parent=51 // pred_fallthru
            _
          %245 = shalt.err (0)
          %s247 = sshll.u32 %s238, 4
          %s248 = int_to_ptr.hbm [resolvable:$true] %s247
          %s249 = sshll.u32 %s239, 4
          %s250 = int_to_ptr.vmem [resolvable:$true] %s249
          %252 = dma.hbm_to_vmem [thread:$0]  %s248, 16, %s250, %s221
          %s253 = sadd.s32 %s216, 2
          %s254 = sld [smem:[#allocation5 + %s253]]
          %s255 = sadd.s32 %s217, 2
          %s256 = scalar_lea.hbm %s1, %s254
          %s257 = scalar_lea.vmem [#allocation2], %s255
          // Predicated region
          $region61: #{tpu_custom_call.1} parent=51 // pred_check
            _
          $region62: #{tpu_custom_call.1} parent=51 // pred_check_branch
            %259 = sbr.rel target = $region64
          $region63: #{tpu_custom_call.1} parent=51 // pred_region
            %260 = sst [smem:[#allocation10]] [#allocation31]
            %261 = sst [smem:[#allocation11]] [#allocation30]
          $region64: #{tpu_custom_call.1} parent=51 // pred_fallthru
            _
          %263 = shalt.err (0)
          %s265 = sshll.u32 %s256, 4
          %s266 = int_to_ptr.hbm [resolvable:$true] %s265
          %s267 = sshll.u32 %s257, 4
          %s268 = int_to_ptr.vmem [resolvable:$true] %s267
          %270 = dma.hbm_to_vmem [thread:$0]  %s266, 16, %s268, %s221
          %s271 = sadd.s32 %s216, 3
          %s272 = sld [smem:[#allocation5 + %s271]]
          %s273 = sadd.s32 %s217, 3
          %s274 = scalar_lea.hbm %s1, %s272
          %s275 = scalar_lea.vmem [#allocation2], %s273
          // Predicated region
          $region65: #{tpu_custom_call.1} parent=51 // pred_check
            _
          $region66: #{tpu_custom_call.1} parent=51 // pred_check_branch
            %277 = sbr.rel target = $region68
          $region67: #{tpu_custom_call.1} parent=51 // pred_region
            %278 = sst [smem:[#allocation10]] [#allocation33]
            %279 = sst [smem:[#allocation11]] [#allocation32]
          $region68: #{tpu_custom_call.1} parent=51 // pred_fallthru
            _
          %281 = shalt.err (0)
          %s283 = sshll.u32 %s274, 4
          %s284 = int_to_ptr.hbm [resolvable:$true] %s283
          %s285 = sshll.u32 %s275, 4
          %s286 = int_to_ptr.vmem [resolvable:$true] %s285
          %288 = dma.hbm_to_vmem [thread:$0]  %s284, 16, %s286, %s221
          %s289 = sadd.s32 %s216, 4
          %s290 = sld [smem:[#allocation5 + %s289]]
          %s291 = sadd.s32 %s217, 4
          %s292 = scalar_lea.hbm %s1, %s290
          %s293 = scalar_lea.vmem [#allocation2], %s291
          // Predicated region
          $region69: #{tpu_custom_call.1} parent=51 // pred_check
            _
          $region70: #{tpu_custom_call.1} parent=51 // pred_check_branch
            %295 = sbr.rel target = $region72
          $region71: #{tpu_custom_call.1} parent=51 // pred_region
            %296 = sst [smem:[#allocation10]] [#allocation35]
            %297 = sst [smem:[#allocation11]] [#allocation34]
          $region72: #{tpu_custom_call.1} parent=51 // pred_fallthru
            _
          %299 = shalt.err (0)
          %s301 = sshll.u32 %s292, 4
          %s302 = int_to_ptr.hbm [resolvable:$true] %s301
          %s303 = sshll.u32 %s293, 4
          %s304 = int_to_ptr.vmem [resolvable:$true] %s303
          %306 = dma.hbm_to_vmem [thread:$0]  %s302, 16, %s304, %s221
          %s307 = sadd.s32 %s216, 5
          %s308 = sld [smem:[#allocation5 + %s307]]
          %s309 = sadd.s32 %s217, 5
          %s310 = scalar_lea.hbm %s1, %s308
          %s311 = scalar_lea.vmem [#allocation2], %s309
          // Predicated region
          $region73: #{tpu_custom_call.1} parent=51 // pred_check
            _
          $region74: #{tpu_custom_call.1} parent=51 // pred_check_branch
            %313 = sbr.rel target = $region76
          $region75: #{tpu_custom_call.1} parent=51 // pred_region
            %314 = sst [smem:[#allocation10]] [#allocation37]
            %315 = sst [smem:[#allocation11]] [#allocation36]
          $region76: #{tpu_custom_call.1} parent=51 // pred_fallthru
            _
          %317 = shalt.err (0)
          %s319 = sshll.u32 %s310, 4
          %s320 = int_to_ptr.hbm [resolvable:$true] %s319
          %s321 = sshll.u32 %s311, 4
          %s322 = int_to_ptr.vmem [resolvable:$true] %s321
          %324 = dma.hbm_to_vmem [thread:$0]  %s320, 16, %s322, %s221
          %s325 = sadd.s32 %s216, 6
          %s326 = sld [smem:[#allocation5 + %s325]]
          %s327 = sadd.s32 %s217, 6
          %s328 = scalar_lea.hbm %s1, %s326
          %s329 = scalar_lea.vmem [#allocation2], %s327
          // Predicated region
          $region77: #{tpu_custom_call.1} parent=51 // pred_check
            _
          $region78: #{tpu_custom_call.1} parent=51 // pred_check_branch
            %331 = sbr.rel target = $region80
          $region79: #{tpu_custom_call.1} parent=51 // pred_region
            %332 = sst [smem:[#allocation10]] [#allocation39]
            %333 = sst [smem:[#allocation11]] [#allocation38]
          $region80: #{tpu_custom_call.1} parent=51 // pred_fallthru
            _
          %335 = shalt.err (0)
          %s337 = sshll.u32 %s328, 4
          %s338 = int_to_ptr.hbm [resolvable:$true] %s337
          %s339 = sshll.u32 %s329, 4
          %s340 = int_to_ptr.vmem [resolvable:$true] %s339
          %342 = dma.hbm_to_vmem [thread:$0]  %s338, 16, %s340, %s221
          %s343 = sadd.s32 %s216, 7
          %s344 = sld [smem:[#allocation5 + %s343]]
          %s345 = sadd.s32 %s217, 7
          %s346 = scalar_lea.hbm %s1, %s344
          %s347 = scalar_lea.vmem [#allocation2], %s345
          // Predicated region
          $region81: #{tpu_custom_call.1} parent=51 // pred_check
            _
          $region82: #{tpu_custom_call.1} parent=51 // pred_check_branch
            %349 = sbr.rel target = $region84
          $region83: #{tpu_custom_call.1} parent=51 // pred_region
            %350 = sst [smem:[#allocation10]] [#allocation41]
            %351 = sst [smem:[#allocation11]] [#allocation40]
          $region84: #{tpu_custom_call.1} parent=51 // pred_fallthru
            _
          %353 = shalt.err (0)
          %s355 = sshll.u32 %s346, 4
          %s356 = int_to_ptr.hbm [resolvable:$true] %s355
          %s357 = sshll.u32 %s347, 4
          %s358 = int_to_ptr.vmem [resolvable:$true] %s357
          %360 = dma.hbm_to_vmem [thread:$0]  %s356, 16, %s358, %s221
        $region52: #{tpu_custom_call.1} parent=11 // pred_fallthru
          _
        %s361 = smul.u32 %s67, 8
        %s362 = scalar_lea.vmem [#allocation2], %s361
        %s363 = scalar_lea.sflag [#allocation3], %s67
        %s364 = smul.u32 8, 1
        %s365 = sshll.u32 %s364, 4
        %366 = dma.done %s363, %s365
        %v367 = vld [vmem:[%s362] sm:$0xff]
        %v368 = vmul.f32 %v367, 11.313708
        %369 = vst [vmem:[%s55] sm:$0xff] %v368
        %s370 = sand.u32 %s28, 1
        %s371 = scalar_lea.sflag [#allocation7], %s370
        %s372 = sand.u32 %s28, 1
        %s373 = smul.addr %s372, 8
        %s374 = scalar_lea.vmem [#allocation6], %s373
        // Predicated region
        $region85: #{tpu_custom_call.1} parent=11 // pred_check
          %p375 = pneg %p34
        $region86: #{tpu_custom_call.1} parent=11 // pred_check_branch
          %377 = sbr.rel (%p375) target = $region88
        $region87: #{tpu_custom_call.1} parent=11 // pred_region
          %379 = vsyncadd %s371, 0
          %s380 = smul.addr %s19, 8
          %s381 = scalar_lea.hbm %s2, %s380
          %s383 = sshll.u32 %s374, 4
          %s384 = int_to_ptr.vmem [resolvable:$true] %s383
          %s385 = sshll.u32 %s381, 4
          %s386 = int_to_ptr.hbm [resolvable:$true] %s385
          %388 = dma.vmem_to_hbm [thread:$0]  %s384, 128, %s386, %s371
        $region88: #{tpu_custom_call.1} parent=11 // pred_fallthru
          _
      $region12: #{tpu_custom_call.1} parent=5 // pred_fallthru
        _
      %p389 = scmp.le.s32.totalorder 1, %s19
      // Predicated region
      $region89: #{tpu_custom_call.1} parent=5 // pred_check
        %p390 = pneg %p389
      $region90: #{tpu_custom_call.1} parent=5 // pred_check_branch
        %392 = sbr.rel (%p390) target = $region92
      $region91: #{tpu_custom_call.1} parent=5 // pred_region
        %s393 = ssub.s32 %s19, 1
        // Predicated region
        $region93: #{tpu_custom_call.1} parent=91 // pred_check
          %p394 = pneg %p40
        $region94: #{tpu_custom_call.1} parent=91 // pred_check_branch
          %396 = sbr.rel (%p394) target = $region96
        $region95: #{tpu_custom_call.1} parent=91 // pred_region
          %s397 = sand.u32 %s31, 1
          %s398 = scalar_lea.sflag [#allocation7], %s397
          %s399 = sand.u32 %s31, 1
          %s400 = smul.addr %s399, 8
          %s401 = scalar_lea.vmem [#allocation6], %s400
          %403 = dma.done %s398, 128
        $region96: #{tpu_custom_call.1} parent=91 // pred_fallthru
          _
      $region92: #{tpu_custom_call.1} parent=5 // pred_fallthru
        _
    $region6: #{tpu_custom_call.1} parent=1 // loop_footer
      %s23 = sadd.s32 1, %s19
    $region7: #{tpu_custom_call.1} parent=1 // loop_footer_branch
      %18 = sbr.rel target = $region3
    $region8: #{tpu_custom_call.1} parent=1 // loop_exit
      _
    %404 = vsyncpa [#allocation7], 1
    %s405 = scalar_lea.sflag [#allocation7], 1
    %406 = vsyncpa %s405, 1
  %407 = vsyncmov [#allocation3]
  %s408 = vpop.sfrf %407
  %p409 = scmp.eq.s32.totalorder %s408, 0
  %p410 = pneg %p409
  %412 = shalt.err (%p410)
  %s413 = scalar_lea.sflag [#allocation3], 1
  %414 = vsyncmov %s413
  %s415 = vpop.sfrf %414
  %p416 = scmp.eq.s32.totalorder %s415, 0
  %p417 = pneg %p416
  %419 = shalt.err (%p417)

</llo_original>
